<compile_context>
chip_gen: v7x
topology: tpu7x:2x2x1
jax: 0.10.0
libtpu: 0.0.40
codegen_flags: <defaults>
</compile_context>

<pallas_src>
import jax
import jax.numpy as jnp
from jax.experimental import pallas as pl
from jax.experimental.pallas import tpu as pltpu

BN_EPS = 1e-5
LANE = 128
SUBLANE = 8


# ----------------------------------------------------------------------------
# Host-side helpers: padding, block-diag, parameter folding
# ----------------------------------------------------------------------------
def _round_up(n, m):
    return ((n + m - 1) // m) * m


def _pad2d(a, rows, cols):
    return jnp.pad(a, ((0, rows - a.shape[0]), (0, cols - a.shape[1])))


def _block_diag(blocks):
    rows = sum(b.shape[0] for b in blocks)
    cols = sum(b.shape[1] for b in blocks)
    out = jnp.zeros((rows, cols), blocks[0].dtype)
    r = c = 0
    for b in blocks:
        out = out.at[r:r + b.shape[0], c:c + b.shape[1]].set(b)
        r += b.shape[0]
        c += b.shape[1]
    return out


def _fold_bn(w, b, gamma, beta, rmean, rvar):
    """Fold eval-mode BatchNorm1d into the preceding Linear (exact)."""
    scale = gamma * jax.lax.rsqrt(rvar + BN_EPS)          # (1, Fout)
    return w * scale, (b - rmean) * scale + beta


def _fold_minmax(w, b, mn, mx):
    """Fold NormLayer (min-max scaling) into the following Linear (exact).

    x_n = (x - mn) * inv, inv = 1/(mx - mn)
    x_n @ W + b == x @ (inv^T * W) + (b - (mn*inv) @ W)

    NOTE: degenerate features (max == min) get scale 0 here; the PyTorch module
    would produce inf/NaN in that case — we intentionally diverge.
    """
    denom = mx - mn
    inv = jnp.where(denom != 0.0, 1.0 / jnp.where(denom != 0.0, denom, 1.0), 0.0)
    return inv.reshape(-1, 1) * w, b - (mn * inv) @ w


# ----------------------------------------------------------------------------
# Fused kernel: the whole forward is a chain of (dot + bias + ReLU) layers
# ----------------------------------------------------------------------------
def _make_fused_kernel(num_layers):
    def kernel(*refs):
        x_ref = refs[0]
        out_ref = refs[-1]
        h = x_ref[...]
        for l in range(num_layers):
            w = refs[1 + 2 * l][...]          # bf16, VMEM-resident
            b = refs[2 + 2 * l][...]          # f32 bias (1, N), broadcasts over rows
            h = jnp.maximum(
                jnp.dot(h.astype(w.dtype), w,
                        preferred_element_type=jnp.float32) + b, 0.0)
        out_ref[...] = h.astype(out_ref.dtype)
    return kernel


# ----------------------------------------------------------------------------
# Raw parameter construction (matches shapes implied by the PyTorch __init__)
# ----------------------------------------------------------------------------
def _init_linear_bn(key, fin, fout):
    kw, kb, kg, kbe, km, kv = jax.random.split(key, 6)
    lim = 1.0 / jnp.sqrt(jnp.float32(fin))
    w = jax.random.uniform(kw, (fin, fout), jnp.float32, -lim, lim)
    b = jax.random.uniform(kb, (1, fout), jnp.float32, -lim, lim)
    gamma = 1.0 + 0.1 * jax.random.normal(kg, (1, fout), jnp.float32)
    beta = 0.1 * jax.random.normal(kbe, (1, fout), jnp.float32)
    rmean = 0.1 * jax.random.normal(km, (1, fout), jnp.float32)
    rvar = 1.0 + 0.1 * jnp.abs(jax.random.normal(kv, (1, fout), jnp.float32))
    return (w, b, gamma, beta, rmean, rvar)


def _init_mlp(key, input_dim, hidden_dims):
    dims = [input_dim] + list(hidden_dims)
    keys = jax.random.split(key, len(dims) - 1)
    return [_init_linear_bn(keys[i], dims[i], dims[i + 1])
            for i in range(len(dims) - 1)]


# ----------------------------------------------------------------------------
# Model
# ----------------------------------------------------------------------------
class MultiEncoderPallas:
    """JAX/Pallas re-implementation of MultiEncoder.forward (eval mode)."""

    def __init__(self, input_dims, separated_layer, shared_layer,
                 normalization_values, key, batch_tile=512):
        self.names = list(input_dims.keys())
        self.input_dims = dict(input_dims)
        self.separated_layer = list(separated_layer)
        self.shared_layer = list(shared_layer)
        # user-supplied batch_tile is forced to a sublane multiple
        self.batch_tile = max(SUBLANE, _round_up(int(batch_tile), SUBLANE))

        keys = jax.random.split(key, len(self.names) + 1)

        # --- raw parameters (kept for the pure-JAX reference check) ---
        self.raw_encoder = {}
        self.raw_norm = {}
        for i, name in enumerate(self.names):
            dim = input_dims[name]
            self.raw_encoder[name] = _init_mlp(keys[i], dim, separated_layer)
            mn = jnp.asarray(normalization_values[name]["min"],
                             jnp.float32).reshape(1, dim)
            mx = jnp.asarray(normalization_values[name]["max"],
                             jnp.float32).reshape(1, dim)
            self.raw_norm[name] = (mn, mx)
        shared_in = len(self.names) * separated_layer[-1]
        self.raw_shared = _init_mlp(keys[-1], shared_in, shared_layer)

        # --- host-side folding (BN + min-max) ---
        folded_enc = {}
        for name in self.names:
            layers = []
            for li, p in enumerate(self.raw_encoder[name]):
                w, b = _fold_bn(*p)
                if li == 0:
                    w, b = _fold_minmax(w, b, *self.raw_norm[name])
                layers.append((w, b))
            folded_enc[name] = layers
        folded_shared = [_fold_bn(*p) for p in self.raw_shared]

        num_mod = len(self.names)
        sep = self.separated_layer
        pad_sep = [_round_up(d, LANE) for d in sep]

        self.fin_total = sum(input_dims[n] for n in self.names)
        self.fin_pad = _round_up(self.fin_total, SUBLANE)   # sublane-align only

        layers = []

        # separated layer 0: block-diagonal over modalities, true fin rows
        w_blocks, b_blocks = [], []
        for name in self.names:
            w, b = folded_enc[name][0]
            w_blocks.append(_pad2d(w, w.shape[0], pad_sep[0]))
            b_blocks.append(_pad2d(b, 1, pad_sep[0]))
        w0 = _pad2d(_block_diag(w_blocks), self.fin_pad, num_mod * pad_sep[0])
        layers.append((w0, jnp.concatenate(b_blocks, axis=1)))

        # separated layers 1.. : block-diagonal on the lane-padded concat
        for l in range(1, len(sep)):
            w_blocks, b_blocks = [], []
            for name in self.names:
                w, b = folded_enc[name][l]
                w_blocks.append(_pad2d(w, pad_sep[l - 1], pad_sep[l]))
                b_blocks.append(_pad2d(b, 1, pad_sep[l]))
            layers.append((_block_diag(w_blocks),
                           jnp.concatenate(b_blocks, axis=1)))

        # shared layer 1: rows rearranged into the lane-padded concat layout
        w1, b1 = folded_shared[0]
        d_last, p_last = sep[-1], pad_sep[-1]
        f1 = _round_up(self.shared_layer[0], LANE)
        w1_full = jnp.zeros((num_mod * p_last, f1), jnp.float32)
        for m in range(num_mod):
            w1_full = w1_full.at[
                m * p_last:m * p_last + d_last, :self.shared_layer[0]
            ].set(w1[m * d_last:(m + 1) * d_last, :])
        layers.append((w1_full, _pad2d(b1, 1, f1)))

        # remaining shared layers
        for l in range(1, len(self.shared_layer)):
            w, b = folded_shared[l]
            layers.append((
                _pad2d(w, _round_up(w.shape[0], LANE), _round_up(w.shape[1], LANE)),
                _pad2d(b, 1, _round_up(b.shape[1], LANE))))

        # weights bf16 (halves DMA bytes + VMEM residency); biases stay f32
        self.layers = [(w.astype(jnp.bfloat16), b.astype(jnp.float32))
                       for (w, b) in layers]
        self.out_pad = self.layers[-1][0].shape[1]

    # ------------------------------------------------------------------
    def __call__(self, x: dict):
        xs = [jnp.asarray(x[name], jnp.float32) for name in self.names]
        batch = xs[0].shape[0]
        x_cat = jnp.concatenate(xs, axis=1)                  # true feature dims
        x_cat = _pad2d(x_cat, batch, self.fin_pad)

        b_ru = _round_up(batch, SUBLANE)
        n_steps = max(1, pl.cdiv(b_ru, self.batch_tile))
        if b_ru > SUBLANE:
            n_steps = max(n_steps, 2)   # >=2 parallel grid steps -> both v7x TCs
        tb = _round_up(pl.cdiv(b_ru, n_steps), SUBLANE)
        b_pad = tb * n_steps
        x_cat = _pad2d(x_cat, b_pad, self.fin_pad)

        out_pad = self._run_fused(x_cat, tb, b_pad)
        return out_pad[:batch, :self.shared_layer[-1]]

    # ------------------------------------------------------------------
    def _run_fused(self, x_cat, tb, b_pad):
        inputs = [x_cat]
        in_specs = [pl.BlockSpec((tb, self.fin_pad), lambda i: (i, 0))]

        # weights/biases: constant index maps -> VMEM-resident across grid steps
        for (w, b) in self.layers:
            inputs += [w, b]
            in_specs += [pl.BlockSpec(w.shape, lambda i: (0, 0)),
                         pl.BlockSpec(b.shape, lambda i: (0, 0))]

        weight_elems = sum(int(w.size) for (w, _) in self.layers)
        param_bytes = sum(int(w.size) * w.dtype.itemsize
                          + int(b.size) * b.dtype.itemsize
                          for (w, b) in self.layers)
        bytes_accessed = (int(x_cat.size) * 4 + param_bytes
                          + b_pad * self.out_pad * 4)

        # explicit VMEM budget (double-buffered blocks + resident params + act slack)
        max_width = max([self.fin_pad] + [w.shape[1] for (w, _) in self.layers])
        vmem_needed = (2 * (tb * self.fin_pad * 4 + tb * self.out_pad * 4
                            + param_bytes)
                       + 4 * tb * max_width * 4)
        vmem_limit = int(min(64 << 20, max(32 << 20, vmem_needed + (4 << 20))))

        kernel = _make_fused_kernel(len(self.layers))

        return pl.pallas_call(
            kernel,
            out_shape=jax.ShapeDtypeStruct((b_pad, self.out_pad), jnp.float32),
            grid=(b_pad // tb,),
            in_specs=in_specs,
            out_specs=pl.BlockSpec((tb, self.out_pad), lambda i: (i, 0)),
            compiler_params=pltpu.CompilerParams(
                dimension_semantics=("parallel",),
                vmem_limit_bytes=vmem_limit),
            cost_estimate=pl.CostEstimate(
                flops=int(2 * b_pad * weight_elems),
                transcendentals=0,
                bytes_accessed=int(bytes_accessed)),
        )(*inputs)


# ----------------------------------------------------------------------------
# Pure-JAX references for correctness checking
# ----------------------------------------------------------------------------
def _reference_forward(model, x):
    """Original-module semantics, un-folded f32 parameters."""
    encoded = []
    for name in model.names:
        h = jnp.asarray(x[name], jnp.float32)
        mn, mx = model.raw_norm[name]
        h = (h - mn) / (mx - mn)
        for (w, b, g, be, rm, rv) in model.raw_encoder[name]:
            z = h @ w + b
            z = (z - rm) * jax.lax.rsqrt(rv + BN_EPS) * g + be
            h = jnp.maximum(z, 0.0)
        encoded.append(h)
    h = jnp.concatenate(encoded, axis=1)
    for (w, b, g, be, rm, rv) in model.raw_shared:
        z = h @ w + b
        z = (z - rm) * jax.lax.rsqrt(rv + BN_EPS) * g + be
        h = jnp.maximum(z, 0.0)
    return h


def _folded_reference(model, x):
    """Exact same math as the kernel (folded bf16 params), in plain JAX."""
    xs = [jnp.asarray(x[name], jnp.float32) for name in model.names]
    h = jnp.concatenate(xs, axis=1)
    h = _pad2d(h, h.shape[0], model.fin_pad)
    for (w, b) in model.layers:
        h = jnp.maximum(
            jnp.dot(h.astype(jnp.bfloat16), w,
                    preferred_element_type=jnp.float32) + b, 0.0)
    return h[:, :model.shared_layer[-1]]


# ----------------------------------------------------------------------------
# Main
# ----------------------------------------------------------------------------
if __name__ == "__main__":
    key = jax.random.PRNGKey(0)

    batch = 8
    input_dims = {"imu": 12, "audio": 20}
    separated_layer = [32, 16]
    shared_layer = [32, 8]

    k_model, k_imu, k_audio = jax.random.split(key, 3)

    normalization_values = {
        "imu": {
            "min": -1.0 * jnp.ones((input_dims["imu"],), jnp.float32),
            "max": jnp.linspace(1.0, 2.0, input_dims["imu"], dtype=jnp.float32),
        },
        "audio": {
            "min": jnp.linspace(-2.0, -1.0, input_dims["audio"], dtype=jnp.float32),
            "max": 2.0 * jnp.ones((input_dims["audio"],), jnp.float32),
        },
    }

    model = MultiEncoderPallas(input_dims, separated_layer, shared_layer,
                               normalization_values, k_model)

    x = {
        "imu": jax.random.normal(k_imu, (batch, input_dims["imu"]), jnp.float32),
        "audio": jax.random.normal(k_audio, (batch, input_dims["audio"]), jnp.float32),
    }

    out = model(x)
    out = jax.block_until_ready(out)

    assert out.shape == (batch, shared_layer[-1]), out.shape
    assert bool(jnp.all(jnp.isfinite(out)))

    # 1) exact-semantics check against a pure-JAX run of the same folded bf16 math
    folded_ref = _folded_reference(model, x)
    assert bool(jnp.allclose(out, folded_ref, atol=1e-3, rtol=1e-3)), (
        float(jnp.max(jnp.abs(out - folded_ref))))

    # 2) looser check against the original f32 module semantics (bf16 weights)
    ref = _reference_forward(model, x)
    assert bool(jnp.allclose(out, ref, atol=5e-2, rtol=5e-2)), (
        float(jnp.max(jnp.abs(out - ref))))

    print("KERNEL_OK")
</pallas_src>

<mosaic_0001>
module attributes {stable_mosaic.version = 11 : i64} {
  func.func @kernel(%arg0: i32, %arg1: memref<8x32xf32, #tpu.memory_space<vmem>>, %arg2: memref<32x256xbf16, #tpu.memory_space<vmem>>, %arg3: memref<1x256xf32, #tpu.memory_space<vmem>>, %arg4: memref<256x256xbf16, #tpu.memory_space<vmem>>, %arg5: memref<1x256xf32, #tpu.memory_space<vmem>>, %arg6: memref<256x128xbf16, #tpu.memory_space<vmem>>, %arg7: memref<1x128xf32, #tpu.memory_space<vmem>>, %arg8: memref<128x128xbf16, #tpu.memory_space<vmem>>, %arg9: memref<1x128xf32, #tpu.memory_space<vmem>>, %arg10: memref<8x128xf32, #tpu.memory_space<vmem>>) attributes {dimension_semantics = [#tpu.dimension_semantics<parallel>], iteration_bounds = array<i64: 1>, scalar_prefetch = 0 : i64, scratch_operands = 0 : i64, tpu.core_type = #tpu.core_type<tc>, window_params = [{transform_indices = @transform_0, window_bounds = array<i64: 8, 32>}, {pipeline_mode = #tpu.pipeline_mode<synchronous>, transform_indices = @transform_1, window_bounds = array<i64: 32, 256>}, {pipeline_mode = #tpu.pipeline_mode<synchronous>, transform_indices = @transform_2, window_bounds = array<i64: 1, 256>}, {pipeline_mode = #tpu.pipeline_mode<synchronous>, transform_indices = @transform_3, window_bounds = array<i64: 256, 256>}, {pipeline_mode = #tpu.pipeline_mode<synchronous>, transform_indices = @transform_4, window_bounds = array<i64: 1, 256>}, {pipeline_mode = #tpu.pipeline_mode<synchronous>, transform_indices = @transform_5, window_bounds = array<i64: 256, 128>}, {pipeline_mode = #tpu.pipeline_mode<synchronous>, transform_indices = @transform_6, window_bounds = array<i64: 1, 128>}, {pipeline_mode = #tpu.pipeline_mode<synchronous>, transform_indices = @transform_7, window_bounds = array<i64: 128, 128>}, {pipeline_mode = #tpu.pipeline_mode<synchronous>, transform_indices = @transform_8, window_bounds = array<i64: 1, 128>}, {transform_indices = @transform_9, window_bounds = array<i64: 8, 128>}]} {
    %c0 = arith.constant 0 : index
    %c0_0 = arith.constant 0 : index
    %0 = vector.load %arg1[%c0, %c0_0] : memref<8x32xf32, #tpu.memory_space<vmem>>, vector<8x32xf32>
    %c0_1 = arith.constant 0 : index
    %c0_2 = arith.constant 0 : index
    %1 = vector.load %arg2[%c0_1, %c0_2] : memref<32x256xbf16, #tpu.memory_space<vmem>>, vector<32x256xbf16>
    %c0_3 = arith.constant 0 : index
    %c0_4 = arith.constant 0 : index
    %2 = vector.load %arg3[%c0_3, %c0_4] : memref<1x256xf32, #tpu.memory_space<vmem>>, vector<1x256xf32>
    %3 = arith.truncf %0 : vector<8x32xf32> to vector<8x32xbf16>
    %cst = arith.constant dense<0.000000e+00> : vector<8x256xf32>
    %4 = tpu.matmul %3, %1, %cst {dimension_numbers = #tpu.dot_dimension_numbers<[1], [0], [0], [1], [0, 0, 1, 1], [], []>} : vector<8x32xbf16>, vector<32x256xbf16>, vector<8x256xf32> -> vector<8x256xf32>
    %5 = vector.broadcast %2 : vector<1x256xf32> to vector<8x256xf32>
    %6 = arith.addf %4, %5 : vector<8x256xf32>
    %cst_5 = arith.constant 0.000000e+00 : f32
    %7 = vector.broadcast %cst_5 : f32 to vector<8x256xf32>
    %8 = arith.maximumf %6, %7 : vector<8x256xf32>
    %c0_6 = arith.constant 0 : index
    %c0_7 = arith.constant 0 : index
    %9 = vector.load %arg4[%c0_6, %c0_7] : memref<256x256xbf16, #tpu.memory_space<vmem>>, vector<256x256xbf16>
    %c0_8 = arith.constant 0 : index
    %c0_9 = arith.constant 0 : index
    %10 = vector.load %arg5[%c0_8, %c0_9] : memref<1x256xf32, #tpu.memory_space<vmem>>, vector<1x256xf32>
    %11 = arith.truncf %8 : vector<8x256xf32> to vector<8x256xbf16>
    %cst_10 = arith.constant dense<0.000000e+00> : vector<8x256xf32>
    %12 = tpu.matmul %11, %9, %cst_10 {dimension_numbers = #tpu.dot_dimension_numbers<[1], [0], [0], [1], [0, 0, 1, 1], [], []>} : vector<8x256xbf16>, vector<256x256xbf16>, vector<8x256xf32> -> vector<8x256xf32>
    %13 = vector.broadcast %10 : vector<1x256xf32> to vector<8x256xf32>
    %14 = arith.addf %12, %13 : vector<8x256xf32>
    %cst_11 = arith.constant 0.000000e+00 : f32
    %15 = vector.broadcast %cst_11 : f32 to vector<8x256xf32>
    %16 = arith.maximumf %14, %15 : vector<8x256xf32>
    %c0_12 = arith.constant 0 : index
    %c0_13 = arith.constant 0 : index
    %17 = vector.load %arg6[%c0_12, %c0_13] : memref<256x128xbf16, #tpu.memory_space<vmem>>, vector<256x128xbf16>
    %c0_14 = arith.constant 0 : index
    %c0_15 = arith.constant 0 : index
    %18 = vector.load %arg7[%c0_14, %c0_15] : memref<1x128xf32, #tpu.memory_space<vmem>>, vector<1x128xf32>
    %19 = arith.truncf %16 : vector<8x256xf32> to vector<8x256xbf16>
    %cst_16 = arith.constant dense<0.000000e+00> : vector<8x128xf32>
    %20 = tpu.matmul %19, %17, %cst_16 {dimension_numbers = #tpu.dot_dimension_numbers<[1], [0], [0], [1], [0, 0, 1, 1], [], []>} : vector<8x256xbf16>, vector<256x128xbf16>, vector<8x128xf32> -> vector<8x128xf32>
    %21 = vector.broadcast %18 : vector<1x128xf32> to vector<8x128xf32>
    %22 = arith.addf %20, %21 : vector<8x128xf32>
    %cst_17 = arith.constant 0.000000e+00 : f32
    %23 = vector.broadcast %cst_17 : f32 to vector<8x128xf32>
    %24 = arith.maximumf %22, %23 : vector<8x128xf32>
    %c0_18 = arith.constant 0 : index
    %c0_19 = arith.constant 0 : index
    %25 = vector.load %arg8[%c0_18, %c0_19] : memref<128x128xbf16, #tpu.memory_space<vmem>>, vector<128x128xbf16>
    %c0_20 = arith.constant 0 : index
    %c0_21 = arith.constant 0 : index
    %26 = vector.load %arg9[%c0_20, %c0_21] : memref<1x128xf32, #tpu.memory_space<vmem>>, vector<1x128xf32>
    %27 = arith.truncf %24 : vector<8x128xf32> to vector<8x128xbf16>
    %cst_22 = arith.constant dense<0.000000e+00> : vector<8x128xf32>
    %28 = tpu.matmul %27, %25, %cst_22 {dimension_numbers = #tpu.dot_dimension_numbers<[1], [0], [0], [1], [0, 0, 1, 1], [], []>} : vector<8x128xbf16>, vector<128x128xbf16>, vector<8x128xf32> -> vector<8x128xf32>
    %29 = vector.broadcast %26 : vector<1x128xf32> to vector<8x128xf32>
    %30 = arith.addf %28, %29 : vector<8x128xf32>
    %cst_23 = arith.constant 0.000000e+00 : f32
    %31 = vector.broadcast %cst_23 : f32 to vector<8x128xf32>
    %32 = arith.maximumf %30, %31 : vector<8x128xf32>
    %c0_24 = arith.constant 0 : index
    %c0_25 = arith.constant 0 : index
    %33 = vector.load %arg10[%c0_24, %c0_25] : memref<8x128xf32, #tpu.memory_space<vmem>>, vector<8x128xf32>
    tpu.vector_store %arg10[%c0_24, %c0_25], %32 {strides = array<i32>} : memref<8x128xf32, #tpu.memory_space<vmem>>, vector<8x128xf32>,
    return
  }
  func.func @transform_0(%arg0: i32) -> (i32, i32) {
    %c0_i32 = arith.constant 0 : i32
    %c0_i32_0 = arith.constant 0 : i32
    return %arg0, %c0_i32 : i32, i32
  }
  func.func @transform_1(%arg0: i32) -> (i32, i32) {
    %c0_i32 = arith.constant 0 : i32
    %c0_i32_0 = arith.constant 0 : i32
    %c0_i32_1 = arith.constant 0 : i32
    return %c0_i32, %c0_i32_0 : i32, i32
  }
  func.func @transform_2(%arg0: i32) -> (i32, i32) {
    %c0_i32 = arith.constant 0 : i32
    %c0_i32_0 = arith.constant 0 : i32
    %c0_i32_1 = arith.constant 0 : i32
    return %c0_i32, %c0_i32_0 : i32, i32
  }
  func.func @transform_3(%arg0: i32) -> (i32, i32) {
    %c0_i32 = arith.constant 0 : i32
    %c0_i32_0 = arith.constant 0 : i32
    %c0_i32_1 = arith.constant 0 : i32
    return %c0_i32, %c0_i32_0 : i32, i32
  }
  func.func @transform_4(%arg0: i32) -> (i32, i32) {
    %c0_i32 = arith.constant 0 : i32
    %c0_i32_0 = arith.constant 0 : i32
    %c0_i32_1 = arith.constant 0 : i32
    return %c0_i32, %c0_i32_0 : i32, i32
  }
  func.func @transform_5(%arg0: i32) -> (i32, i32) {
    %c0_i32 = arith.constant 0 : i32
    %c0_i32_0 = arith.constant 0 : i32
    %c0_i32_1 = arith.constant 0 : i32
    return %c0_i32, %c0_i32_0 : i32, i32
  }
  func.func @transform_6(%arg0: i32) -> (i32, i32) {
    %c0_i32 = arith.constant 0 : i32
    %c0_i32_0 = arith.constant 0 : i32
    %c0_i32_1 = arith.constant 0 : i32
    return %c0_i32, %c0_i32_0 : i32, i32
  }
  func.func @transform_7(%arg0: i32) -> (i32, i32) {
    %c0_i32 = arith.constant 0 : i32
    %c0_i32_0 = arith.constant 0 : i32
    %c0_i32_1 = arith.constant 0 : i32
    return %c0_i32, %c0_i32_0 : i32, i32
  }
  func.func @transform_8(%arg0: i32) -> (i32, i32) {
    %c0_i32 = arith.constant 0 : i32
    %c0_i32_0 = arith.constant 0 : i32
    %c0_i32_1 = arith.constant 0 : i32
    return %c0_i32, %c0_i32_0 : i32, i32
  }
  func.func @transform_9(%arg0: i32) -> (i32, i32) {
    %c0_i32 = arith.constant 0 : i32
    %c0_i32_0 = arith.constant 0 : i32
    return %arg0, %c0_i32 : i32, i32
  }
}

</mosaic_0001>

<llo_original>
// kernel: tpu_custom_call.1
$region0: #{tpu_custom_call.1}
  #allocation0 [shape = 'u32[]', space=smem, size = 0x4, offset = 0x4, fixed_abs, tag = 'smem constant byte address 0x4 - core index']
  #allocation1 [shape = 'u32[144,128]{1,0:T(1,128)}', space=vmem, size = 0x12000, scoped, tag = 'internal scratch']
  %s0 = inlined_call_operand.hbm [shape: f32[8,32], index: 0, kind: input, shape index: {}]
  %s1 = inlined_call_operand.hbm [shape: bf16[32,256], index: 1, kind: input, shape index: {}]
  %s2 = inlined_call_operand.vmem [shape: f32[1,256], index: 2, kind: input, shape index: {}]
  %s3 = inlined_call_operand.hbm [shape: bf16[256,256], index: 3, kind: input, shape index: {}]
  %s4 = inlined_call_operand.vmem [shape: f32[1,256], index: 4, kind: input, shape index: {}]
  %s5 = inlined_call_operand.hbm [shape: bf16[256,128], index: 5, kind: input, shape index: {}]
  %s6 = inlined_call_operand.vmem [shape: f32[1,128], index: 6, kind: input, shape index: {}]
  %s7 = inlined_call_operand.hbm [shape: bf16[128,128], index: 7, kind: input, shape index: {}]
  %s8 = inlined_call_operand.vmem [shape: f32[1,128], index: 8, kind: input, shape index: {}]
  %s9 = inlined_call_operand.hbm [shape: f32[8,128], index: 9, kind: output, shape index: {}]
  %s10 = sld [smem:[#allocation0]]
  $region66: #{tpu_custom_call.1} parent=0
    _
  %s12 = ssub.s32 1, %s10
  %s13 = scalar_select 0, %s12, %s10
  $region1: #{tpu_custom_call.1} parent=0
    #allocation2 [shape = 'u8[4096]{0}', space=vmem, size = 0x1000, scoped, tag = 'input window, operand 0, single buffered']
    #allocation3 [shape = 's32[1]{0}', space=sflag, size = 0x4, scoped, tag = 'scoped memory for tpu_custom_call.1']
    #allocation4 [shape = 's32[1]{0}', space=sflag, size = 0x4, scoped, tag = 'scoped memory for tpu_custom_call.1']
    #allocation5 [shape = 'u8[16384]{0}', space=vmem, size = 0x4000, scoped, tag = 'input window, operand 1, single buffered']
    #allocation6 [shape = 's32[1]{0}', space=sflag, size = 0x4, scoped, tag = 'scoped memory for tpu_custom_call.1']
    #allocation7 [shape = 'u8[131072]{0}', space=vmem, size = 0x20000, scoped, tag = 'input window, operand 3, single buffered']
    #allocation8 [shape = 'u8[65536]{0}', space=vmem, size = 0x10000, scoped, tag = 'input window, operand 5, single buffered']
    #allocation9 [shape = 's32[1]{0}', space=sflag, size = 0x4, scoped, tag = 'scoped memory for tpu_custom_call.1']
    #allocation10 [shape = 'u8[32768]{0}', space=vmem, size = 0x8000, scoped, tag = 'input window, operand 7, single buffered']
    #allocation11 [shape = 'u8[4096]{0}', space=vmem, size = 0x1000, scoped, tag = 'output window, operand 0, single buffered']
    %14 = vsyncpa [#allocation3], 0
    %15 = vsyncpa [#allocation6], 0
    %16 = vsyncpa [#allocation9], 0
    %17 = vsyncpa [#allocation4], 0
    // Predicated region
    $region2: #{tpu_custom_call.1} parent=1 // pred_check
      _
    $region3: #{tpu_custom_call.1} parent=1 // pred_check_branch
      %19 = sbr.rel (0) target = $region5
    $region4: #{tpu_custom_call.1} parent=1 // pred_region
      %s21 = ssub.s32 128, 128
      %22 = vsyncadd [#allocation3], %s21
      %s24 = sshll.u32 [#allocation2], 4
      %s25 = int_to_ptr.vmem [resolvable:$true] %s24
      %27 = dma.hbm_to_vmem [thread:$0]  %s0, 128, %s25, [#allocation3]
    $region5: #{tpu_custom_call.1} parent=1 // pred_fallthru
      _
    // Predicated region
    $region6: #{tpu_custom_call.1} parent=1 // pred_check
      _
    $region7: #{tpu_custom_call.1} parent=1 // pred_check_branch
      %29 = sbr.rel (0) target = $region9
    $region8: #{tpu_custom_call.1} parent=1 // pred_region
      %s31 = ssub.s32 512, 512
      %32 = vsyncadd [#allocation6], %s31
      %s33 = sshll.u32 [#allocation5], 4
      %s34 = int_to_ptr.vmem [resolvable:$true] %s33
      %39 = dma.hbm_to_vmem [thread:$0]  %s1, 512, %s34, [#allocation6], 128, 128, 8
    $region9: #{tpu_custom_call.1} parent=1 // pred_fallthru
      _
    // Predicated region
    $region10: #{tpu_custom_call.1} parent=1 // pred_check
      _
    $region11: #{tpu_custom_call.1} parent=1 // pred_check_branch
      %41 = sbr.rel (0) target = $region13
    $region12: #{tpu_custom_call.1} parent=1 // pred_region
      _
    $region13: #{tpu_custom_call.1} parent=1 // pred_fallthru
      _
    // Predicated region
    $region14: #{tpu_custom_call.1} parent=1 // pred_check
      _
    $region15: #{tpu_custom_call.1} parent=1 // pred_check_branch
      %43 = sbr.rel (0) target = $region17
    $region16: #{tpu_custom_call.1} parent=1 // pred_region
      %s45 = ssub.s32 4096, 4096
      %46 = vsyncadd [#allocation6], %s45
      %s47 = sshll.u32 [#allocation7], 4
      %s48 = int_to_ptr.vmem [resolvable:$true] %s47
      %53 = dma.hbm_to_vmem [thread:$0]  %s3, 4096, %s48, [#allocation6], 128, 128, 8
    $region17: #{tpu_custom_call.1} parent=1 // pred_fallthru
      _
    // Predicated region
    $region18: #{tpu_custom_call.1} parent=1 // pred_check
      _
    $region19: #{tpu_custom_call.1} parent=1 // pred_check_branch
      %55 = sbr.rel (0) target = $region21
    $region20: #{tpu_custom_call.1} parent=1 // pred_region
      _
    $region21: #{tpu_custom_call.1} parent=1 // pred_fallthru
      _
    // Predicated region
    $region22: #{tpu_custom_call.1} parent=1 // pred_check
      _
    $region23: #{tpu_custom_call.1} parent=1 // pred_check_branch
      %57 = sbr.rel (0) target = $region25
    $region24: #{tpu_custom_call.1} parent=1 // pred_region
      %s59 = ssub.s32 2048, 2048
      %60 = vsyncadd [#allocation9], %s59
      %s61 = sshll.u32 [#allocation8], 4
      %s62 = int_to_ptr.vmem [resolvable:$true] %s61
      %67 = dma.hbm_to_vmem [thread:$0]  %s5, 2048, %s62, [#allocation9], 64, 64, 4
    $region25: #{tpu_custom_call.1} parent=1 // pred_fallthru
      _
    // Predicated region
    $region26: #{tpu_custom_call.1} parent=1 // pred_check
      _
    $region27: #{tpu_custom_call.1} parent=1 // pred_check_branch
      %69 = sbr.rel (0) target = $region29
    $region28: #{tpu_custom_call.1} parent=1 // pred_region
      _
    $region29: #{tpu_custom_call.1} parent=1 // pred_fallthru
      _
    // Predicated region
    $region30: #{tpu_custom_call.1} parent=1 // pred_check
      _
    $region31: #{tpu_custom_call.1} parent=1 // pred_check_branch
      %71 = sbr.rel (0) target = $region33
    $region32: #{tpu_custom_call.1} parent=1 // pred_region
      %s73 = ssub.s32 1024, 1024
      %74 = vsyncadd [#allocation9], %s73
      %s75 = sshll.u32 [#allocation10], 4
      %s76 = int_to_ptr.vmem [resolvable:$true] %s75
      %81 = dma.hbm_to_vmem [thread:$0]  %s7, 1024, %s76, [#allocation9], 64, 64, 4
    $region33: #{tpu_custom_call.1} parent=1 // pred_fallthru
      _
    // Predicated region
    $region34: #{tpu_custom_call.1} parent=1 // pred_check
      _
    $region35: #{tpu_custom_call.1} parent=1 // pred_check_branch
      %83 = sbr.rel (0) target = $region37
    $region36: #{tpu_custom_call.1} parent=1 // pred_region
      _
    $region37: #{tpu_custom_call.1} parent=1 // pred_fallthru
      _
    // Predicated region
    $region38: #{tpu_custom_call.1} parent=1 // pred_check
      _
    $region39: #{tpu_custom_call.1} parent=1 // pred_check_branch
      %85 = sbr.rel (0) target = $region41
    $region40: #{tpu_custom_call.1} parent=1 // pred_region
      %86 = dma.done [#allocation3], 128
    $region41: #{tpu_custom_call.1} parent=1 // pred_fallthru
      _
    // Predicated region
    $region42: #{tpu_custom_call.1} parent=1 // pred_check
      _
    $region43: #{tpu_custom_call.1} parent=1 // pred_check_branch
      %88 = sbr.rel (0) target = $region45
    $region44: #{tpu_custom_call.1} parent=1 // pred_region
      %89 = dma.done [#allocation6], 512
    $region45: #{tpu_custom_call.1} parent=1 // pred_fallthru
      _
    // Predicated region
    $region46: #{tpu_custom_call.1} parent=1 // pred_check
      _
    $region47: #{tpu_custom_call.1} parent=1 // pred_check_branch
      %91 = sbr.rel (0) target = $region49
    $region48: #{tpu_custom_call.1} parent=1 // pred_region
      %92 = dma.done [#allocation6], 4096
    $region49: #{tpu_custom_call.1} parent=1 // pred_fallthru
      _
    // Predicated region
    $region50: #{tpu_custom_call.1} parent=1 // pred_check
      _
    $region51: #{tpu_custom_call.1} parent=1 // pred_check_branch
      %94 = sbr.rel (0) target = $region53
    $region52: #{tpu_custom_call.1} parent=1 // pred_region
      %95 = dma.done [#allocation9], 2048
    $region53: #{tpu_custom_call.1} parent=1 // pred_fallthru
      _
    // Predicated region
    $region54: #{tpu_custom_call.1} parent=1 // pred_check
      _
    $region55: #{tpu_custom_call.1} parent=1 // pred_check_branch
      %97 = sbr.rel (0) target = $region57
    $region56: #{tpu_custom_call.1} parent=1 // pred_region
      %98 = dma.done [#allocation9], 1024
    $region57: #{tpu_custom_call.1} parent=1 // pred_fallthru
      _
    %v100 = vld [vmem:[#allocation2] sm:$0xff]
    %v101 = vld [vmem:[#allocation5] sm:$0xff]
    %v102 = vld [vmem:[#allocation5 + $0x8] sm:$0xff]
    %v103 = vld [vmem:[#allocation5 + $0x10] sm:$0xff]
    %v104 = vld [vmem:[#allocation5 + $0x18] sm:$0xff]
    %v105 = vld [vmem:[%s2] sm:$0x3]
    %v106 = vpack.c.bf16 %v100, %v100
    %v108 = vlaneseq
    %v109 = vshrl.u32 %v108, 7
    %v110 = vsub.s32 0, %v109
    %v111 = vrot.slane %v105, %v110
    %v112 = vlaneseq
    %v113 = vshrl.u32 %v112, 7
    %v114 = vsub.s32 1, %v113
    %v115 = vrot.slane %v105, %v114
    %v122 = vunpack.c.l.b16 %v101
    %v123 = vunpack.c.h.b16 %v101
    %v124 = vunpack.c.l.b16 %v102
    %v125 = vunpack.c.h.b16 %v102
    %v126 = vunpack.c.l.b16 %v103
    %v127 = vunpack.c.h.b16 %v103
    %v128 = vunpack.c.l.b16 %v104
    %v129 = vunpack.c.h.b16 %v104
    %v130 = vpack.c.b16 %v124, %v122
    %v131 = vpack.c.b16 %v125, %v123
    %v132 = vpack.c.b16 %v128, %v126
    %v133 = vpack.c.b16 %v129, %v127
    %vm138 = vcmask 261120
    %v140 = vsel %vm138, %v106, 0
    %142 = vmatprep.subr.bf16.mxu0 %v131
    %143 = vmatpush1.bf16.msra.mxu0 %v130
    %144 = vmatprep.subr.bf16.mxu0 %v133
    %145 = vmatpush1.bf16.msra.mxu0 %v132
    %146 = vmatprep.subr.bf16.mxu0 0
    %147 = vmatpush1.bf16.msra.mxu0 0
    %148 = vmatprep.subr.bf16.mxu0 0
    %149 = vmatpush1.bf16.msra.mxu0 0
    %150 = vmatprep.subr.bf16.mxu0 0
    %151 = vmatpush1.bf16.msra.mxu0 0
    %152 = vmatprep.subr.bf16.mxu0 0
    %153 = vmatpush1.bf16.msra.mxu0 0
    %154 = vmatprep.subr.bf16.mxu0 0
    %155 = vmatpush1.bf16.msra.mxu0 0
    %156 = vmatprep.subr.bf16.mxu0 0
    %157 = vmatpush1.bf16.msra.mxu0 0
    %158 = vmatprep.subr.bf16.mxu0 0
    %159 = vmatpush1.bf16.msra.mxu0 0
    %160 = vmatprep.subr.bf16.mxu0 0
    %161 = vmatpush1.bf16.msra.mxu0 0
    %162 = vmatprep.subr.bf16.mxu0 0
    %163 = vmatpush1.bf16.msra.mxu0 0
    %164 = vmatprep.subr.bf16.mxu0 0
    %165 = vmatpush1.bf16.msra.mxu0 0
    %166 = vmatprep.subr.bf16.mxu0 0
    %167 = vmatpush1.bf16.msra.mxu0 0
    %168 = vmatprep.subr.bf16.mxu0 0
    %169 = vmatpush1.bf16.msra.mxu0 0
    %170 = vmatprep.subr.bf16.mxu0 0
    %171 = vmatpush1.bf16.msra.mxu0 0
    %172 = vmatprep.subr.bf16.mxu0 0
    %173 = vmatpush1.bf16.msra.mxu0 0
    %174 = vmatprep.mubr.bf16.mxu0 0
    %175 = vmatmul.mubr.bf16.gmra.mrb[0].mxu0 %v140
    %v176 = vpop.f32.mrb[0].mxu0
    %v177 = vadd.f32 %v111, %v176
    %v178 = vpop.f32.mrb[0].mxu0
    %v179 = vadd.f32 %v115, %v178
    %v180 = vpop.f32.mrb[0].mxu0
    %v181 = vpop.f32.mrb[0].mxu0
    %182 = vdwg.mxu0
    %v183 = vmax.f32 %v177, 0.0
    %v184 = vmax.f32 %v179, 0.0
    %v185 = vld [vmem:[#allocation7] sm:$0xff]
    %v186 = vld [vmem:[#allocation7 + $0x8] sm:$0xff]
    %v187 = vld [vmem:[#allocation7 + $0x10] sm:$0xff]
    %v188 = vld [vmem:[#allocation7 + $0x18] sm:$0xff]
    %v189 = vld [vmem:[#allocation7 + $0x20] sm:$0xff]
    %v190 = vld [vmem:[#allocation7 + $0x28] sm:$0xff]
    %v191 = vld [vmem:[#allocation7 + $0x30] sm:$0xff]
    %v192 = vld [vmem:[#allocation7 + $0x38] sm:$0xff]
    %v193 = vld [vmem:[#allocation7 + $0x40] sm:$0xff]
    %v194 = vld [vmem:[#allocation7 + $0x48] sm:$0xff]
    %v195 = vld [vmem:[#allocation7 + $0x50] sm:$0xff]
    %v196 = vld [vmem:[#allocation7 + $0x58] sm:$0xff]
    %v197 = vld [vmem:[#allocation7 + $0x60] sm:$0xff]
    %v198 = vld [vmem:[#allocation7 + $0x68] sm:$0xff]
    %v199 = vld [vmem:[#allocation7 + $0x70] sm:$0xff]
    %v200 = vld [vmem:[#allocation7 + $0x78] sm:$0xff]
    %v201 = vld [vmem:[#allocation7 + $0x80] sm:$0xff]
    %v202 = vld [vmem:[#allocation7 + $0x88] sm:$0xff]
    %v203 = vld [vmem:[#allocation7 + $0x90] sm:$0xff]
    %v204 = vld [vmem:[#allocation7 + $0x98] sm:$0xff]
    %v205 = vld [vmem:[#allocation7 + $0xa0] sm:$0xff]
    %v206 = vld [vmem:[#allocation7 + $0xa8] sm:$0xff]
    %v207 = vld [vmem:[#allocation7 + $0xb0] sm:$0xff]
    %v208 = vld [vmem:[#allocation7 + $0xb8] sm:$0xff]
    %v209 = vld [vmem:[#allocation7 + $0xc0] sm:$0xff]
    %v210 = vld [vmem:[#allocation7 + $0xc8] sm:$0xff]
    %v211 = vld [vmem:[#allocation7 + $0xd0] sm:$0xff]
    %v212 = vld [vmem:[#allocation7 + $0xd8] sm:$0xff]
    %v213 = vld [vmem:[#allocation7 + $0xe0] sm:$0xff]
    %v214 = vld [vmem:[#allocation7 + $0xe8] sm:$0xff]
    %v215 = vld [vmem:[#allocation7 + $0xf0] sm:$0xff]
    %v216 = vld [vmem:[#allocation7 + $0xf8] sm:$0xff]
    %v217 = vld [vmem:[%s4] sm:$0x3]
    %v218 = vpack.c.bf16 %v183, %v183
    %v219 = vpack.c.bf16 %v184, %v184
    %v221 = vlaneseq
    %v222 = vshrl.u32 %v221, 7
    %v223 = vsub.s32 0, %v222
    %v224 = vrot.slane %v217, %v223
    %v225 = vlaneseq
    %v226 = vshrl.u32 %v225, 7
    %v227 = vsub.s32 1, %v226
    %v228 = vrot.slane %v217, %v227
    %v263 = vunpack.c.l.b16 %v185
    %v264 = vunpack.c.h.b16 %v185
    %v265 = vunpack.c.l.b16 %v186
    %v266 = vunpack.c.h.b16 %v186
    %v267 = vunpack.c.l.b16 %v187
    %v268 = vunpack.c.h.b16 %v187
    %v269 = vunpack.c.l.b16 %v188
    %v270 = vunpack.c.h.b16 %v188
    %v271 = vunpack.c.l.b16 %v189
    %v272 = vunpack.c.h.b16 %v189
    %v273 = vunpack.c.l.b16 %v190
    %v274 = vunpack.c.h.b16 %v190
    %v275 = vunpack.c.l.b16 %v191
    %v276 = vunpack.c.h.b16 %v191
    %v277 = vunpack.c.l.b16 %v192
    %v278 = vunpack.c.h.b16 %v192
    %v279 = vunpack.c.l.b16 %v193
    %v280 = vunpack.c.h.b16 %v193
    %v281 = vunpack.c.l.b16 %v194
    %v282 = vunpack.c.h.b16 %v194
    %v283 = vunpack.c.l.b16 %v195
    %v284 = vunpack.c.h.b16 %v195
    %v285 = vunpack.c.l.b16 %v196
    %v286 = vunpack.c.h.b16 %v196
    %v287 = vunpack.c.l.b16 %v197
    %v288 = vunpack.c.h.b16 %v197
    %v289 = vunpack.c.l.b16 %v198
    %v290 = vunpack.c.h.b16 %v198
    %v291 = vunpack.c.l.b16 %v199
    %v292 = vunpack.c.h.b16 %v199
    %v293 = vunpack.c.l.b16 %v200
    %v294 = vunpack.c.h.b16 %v200
    %v295 = vunpack.c.l.b16 %v201
    %v296 = vunpack.c.h.b16 %v201
    %v297 = vunpack.c.l.b16 %v202
    %v298 = vunpack.c.h.b16 %v202
    %v299 = vunpack.c.l.b16 %v203
    %v300 = vunpack.c.h.b16 %v203
    %v301 = vunpack.c.l.b16 %v204
    %v302 = vunpack.c.h.b16 %v204
    %v303 = vunpack.c.l.b16 %v205
    %v304 = vunpack.c.h.b16 %v205
    %v305 = vunpack.c.l.b16 %v206
    %v306 = vunpack.c.h.b16 %v206
    %v307 = vunpack.c.l.b16 %v207
    %v308 = vunpack.c.h.b16 %v207
    %v309 = vunpack.c.l.b16 %v208
    %v310 = vunpack.c.h.b16 %v208
    %v311 = vunpack.c.l.b16 %v209
    %v312 = vunpack.c.h.b16 %v209
    %v313 = vunpack.c.l.b16 %v210
    %v314 = vunpack.c.h.b16 %v210
    %v315 = vunpack.c.l.b16 %v211
    %v316 = vunpack.c.h.b16 %v211
    %v317 = vunpack.c.l.b16 %v212
    %v318 = vunpack.c.h.b16 %v212
    %v319 = vunpack.c.l.b16 %v213
    %v320 = vunpack.c.h.b16 %v213
    %v321 = vunpack.c.l.b16 %v214
    %v322 = vunpack.c.h.b16 %v214
    %v323 = vunpack.c.l.b16 %v215
    %v324 = vunpack.c.h.b16 %v215
    %v325 = vunpack.c.l.b16 %v216
    %v326 = vunpack.c.h.b16 %v216
    %v327 = vpack.c.b16 %v265, %v263
    %v328 = vpack.c.b16 %v266, %v264
    %v329 = vpack.c.b16 %v269, %v267
    %v330 = vpack.c.b16 %v270, %v268
    %v331 = vpack.c.b16 %v273, %v271
    %v332 = vpack.c.b16 %v274, %v272
    %v333 = vpack.c.b16 %v277, %v275
    %v334 = vpack.c.b16 %v278, %v276
    %v335 = vpack.c.b16 %v281, %v279
    %v336 = vpack.c.b16 %v282, %v280
    %v337 = vpack.c.b16 %v285, %v283
    %v338 = vpack.c.b16 %v286, %v284
    %v339 = vpack.c.b16 %v289, %v287
    %v340 = vpack.c.b16 %v290, %v288
    %v341 = vpack.c.b16 %v293, %v291
    %v342 = vpack.c.b16 %v294, %v292
    %v343 = vpack.c.b16 %v297, %v295
    %v344 = vpack.c.b16 %v298, %v296
    %v345 = vpack.c.b16 %v301, %v299
    %v346 = vpack.c.b16 %v302, %v300
    %v347 = vpack.c.b16 %v305, %v303
    %v348 = vpack.c.b16 %v306, %v304
    %v349 = vpack.c.b16 %v309, %v307
    %v350 = vpack.c.b16 %v310, %v308
    %v351 = vpack.c.b16 %v313, %v311
    %v352 = vpack.c.b16 %v314, %v312
    %v353 = vpack.c.b16 %v317, %v315
    %v354 = vpack.c.b16 %v318, %v316
    %v355 = vpack.c.b16 %v321, %v319
    %v356 = vpack.c.b16 %v322, %v320
    %v357 = vpack.c.b16 %v325, %v323
    %v358 = vpack.c.b16 %v326, %v324
    %391 = vmatprep.subr.bf16.mxu0 %v328
    %392 = vmatpush1.bf16.msra.mxu0 %v327
    %393 = vmatprep.subr.bf16.mxu0 %v330
    %394 = vmatpush1.bf16.msra.mxu0 %v329
    %395 = vmatprep.subr.bf16.mxu0 %v332
    %396 = vmatpush1.bf16.msra.mxu0 %v331
    %397 = vmatprep.subr.bf16.mxu0 %v334
    %398 = vmatpush1.bf16.msra.mxu0 %v333
    %399 = vmatprep.subr.bf16.mxu0 %v336
    %400 = vmatpush1.bf16.msra.mxu0 %v335
    %401 = vmatprep.subr.bf16.mxu0 %v338
    %402 = vmatpush1.bf16.msra.mxu0 %v337
    %403 = vmatprep.subr.bf16.mxu0 %v340
    %404 = vmatpush1.bf16.msra.mxu0 %v339
    %405 = vmatprep.subr.bf16.mxu0 %v342
    %406 = vmatpush1.bf16.msra.mxu0 %v341
    %407 = vmatprep.subr.bf16.mxu0 %v344
    %408 = vmatpush1.bf16.msra.mxu0 %v343
    %409 = vmatprep.subr.bf16.mxu0 %v346
    %410 = vmatpush1.bf16.msra.mxu0 %v345
    %411 = vmatprep.subr.bf16.mxu0 %v348
    %412 = vmatpush1.bf16.msra.mxu0 %v347
    %413 = vmatprep.subr.bf16.mxu0 %v350
    %414 = vmatpush1.bf16.msra.mxu0 %v349
    %415 = vmatprep.subr.bf16.mxu0 %v352
    %416 = vmatpush1.bf16.msra.mxu0 %v351
    %417 = vmatprep.subr.bf16.mxu0 %v354
    %418 = vmatpush1.bf16.msra.mxu0 %v353
    %419 = vmatprep.subr.bf16.mxu0 %v356
    %420 = vmatpush1.bf16.msra.mxu0 %v355
    %421 = vmatprep.subr.bf16.mxu0 %v358
    %422 = vmatpush1.bf16.msra.mxu0 %v357
    %423 = vmatprep.mubr.bf16.mxu0 %v219
    %424 = vmatmul.mubr.bf16.gmra.mrb[0].mxu0 %v218
    %v425 = vpop.f32.mrb[0].mxu0
    %v426 = vadd.f32 %v224, %v425
    %v427 = vpop.f32.mrb[0].mxu0
    %v428 = vadd.f32 %v228, %v427
    %v429 = vpop.f32.mrb[0].mxu0
    %v430 = vpop.f32.mrb[0].mxu0
    %431 = vdwg.mxu0
    %v432 = vmax.f32 %v426, 0.0
    %v433 = vmax.f32 %v428, 0.0
    %v434 = vld [vmem:[#allocation8] sm:$0xf]
    %v435 = vld [vmem:[#allocation8 + $0x4] sm:$0xf]
    %v436 = vld [vmem:[#allocation8 + $0x8] sm:$0xf]
    %v437 = vld [vmem:[#allocation8 + $0xc] sm:$0xf]
    %v438 = vld [vmem:[#allocation8 + $0x10] sm:$0xf]
    %v439 = vld [vmem:[#allocation8 + $0x14] sm:$0xf]
    %v440 = vld [vmem:[#allocation8 + $0x18] sm:$0xf]
    %v441 = vld [vmem:[#allocation8 + $0x1c] sm:$0xf]
    %v442 = vld [vmem:[#allocation8 + $0x20] sm:$0xf]
    %v443 = vld [vmem:[#allocation8 + $0x24] sm:$0xf]
    %v444 = vld [vmem:[#allocation8 + $0x28] sm:$0xf]
    %v445 = vld [vmem:[#allocation8 + $0x2c] sm:$0xf]
    %v446 = vld [vmem:[#allocation8 + $0x30] sm:$0xf]
    %v447 = vld [vmem:[#allocation8 + $0x34] sm:$0xf]
    %v448 = vld [vmem:[#allocation8 + $0x38] sm:$0xf]
    %v449 = vld [vmem:[#allocation8 + $0x3c] sm:$0xf]
    %v450 = vld [vmem:[#allocation8 + $0x40] sm:$0xf]
    %v451 = vld [vmem:[#allocation8 + $0x44] sm:$0xf]
    %v452 = vld [vmem:[#allocation8 + $0x48] sm:$0xf]
    %v453 = vld [vmem:[#allocation8 + $0x4c] sm:$0xf]
    %v454 = vld [vmem:[#allocation8 + $0x50] sm:$0xf]
    %v455 = vld [vmem:[#allocation8 + $0x54] sm:$0xf]
    %v456 = vld [vmem:[#allocation8 + $0x58] sm:$0xf]
    %v457 = vld [vmem:[#allocation8 + $0x5c] sm:$0xf]
    %v458 = vld [vmem:[#allocation8 + $0x60] sm:$0xf]
    %v459 = vld [vmem:[#allocation8 + $0x64] sm:$0xf]
    %v460 = vld [vmem:[#allocation8 + $0x68] sm:$0xf]
    %v461 = vld [vmem:[#allocation8 + $0x6c] sm:$0xf]
    %v462 = vld [vmem:[#allocation8 + $0x70] sm:$0xf]
    %v463 = vld [vmem:[#allocation8 + $0x74] sm:$0xf]
    %v464 = vld [vmem:[#allocation8 + $0x78] sm:$0xf]
    %v465 = vld [vmem:[#allocation8 + $0x7c] sm:$0xf]
    %v466 = vld [vmem:[%s6] sm:$0x1]
    %v467 = vpack.c.bf16 %v432, %v432
    %v468 = vpack.c.bf16 %v433, %v433
    %v470 = vlaneseq
    %v471 = vshrl.u32 %v470, 7
    %v472 = vsub.s32 0, %v471
    %v473 = vrot.slane %v466, %v472
    %v507 = vunpack.c.l.b16 %v434
    %v508 = vunpack.c.l.b16 %v435
    %v509 = vunpack.c.l.b16 %v436
    %v510 = vunpack.c.l.b16 %v437
    %v511 = vunpack.c.l.b16 %v438
    %v512 = vunpack.c.l.b16 %v439
    %v513 = vunpack.c.l.b16 %v440
    %v514 = vunpack.c.l.b16 %v441
    %v515 = vunpack.c.l.b16 %v442
    %v516 = vunpack.c.l.b16 %v443
    %v517 = vunpack.c.l.b16 %v444
    %v518 = vunpack.c.l.b16 %v445
    %v519 = vunpack.c.l.b16 %v446
    %v520 = vunpack.c.l.b16 %v447
    %v521 = vunpack.c.l.b16 %v448
    %v522 = vunpack.c.l.b16 %v449
    %v523 = vunpack.c.l.b16 %v450
    %v524 = vunpack.c.l.b16 %v451
    %v525 = vunpack.c.l.b16 %v452
    %v526 = vunpack.c.l.b16 %v453
    %v527 = vunpack.c.l.b16 %v454
    %v528 = vunpack.c.l.b16 %v455
    %v529 = vunpack.c.l.b16 %v456
    %v530 = vunpack.c.l.b16 %v457
    %v531 = vunpack.c.l.b16 %v458
    %v532 = vunpack.c.l.b16 %v459
    %v533 = vunpack.c.l.b16 %v460
    %v534 = vunpack.c.l.b16 %v461
    %v535 = vunpack.c.l.b16 %v462
    %v536 = vunpack.c.l.b16 %v463
    %v537 = vunpack.c.l.b16 %v464
    %v538 = vunpack.c.l.b16 %v465
    %v539 = vpack.c.b16 %v508, %v507
    %v540 = vpack.c.b16 %v510, %v509
    %v541 = vpack.c.b16 %v512, %v511
    %v542 = vpack.c.b16 %v514, %v513
    %v543 = vpack.c.b16 %v516, %v515
    %v544 = vpack.c.b16 %v518, %v517
    %v545 = vpack.c.b16 %v520, %v519
    %v546 = vpack.c.b16 %v522, %v521
    %v547 = vpack.c.b16 %v524, %v523
    %v548 = vpack.c.b16 %v526, %v525
    %v549 = vpack.c.b16 %v528, %v527
    %v550 = vpack.c.b16 %v530, %v529
    %v551 = vpack.c.b16 %v532, %v531
    %v552 = vpack.c.b16 %v534, %v533
    %v553 = vpack.c.b16 %v536, %v535
    %v554 = vpack.c.b16 %v538, %v537
    %571 = vmatprep.subr.bf16.mxu0 0
    %572 = vmatpush1.bf16.msra.mxu0 %v539
    %573 = vmatprep.subr.bf16.mxu0 0
    %574 = vmatpush1.bf16.msra.mxu0 %v540
    %575 = vmatprep.subr.bf16.mxu0 0
    %576 = vmatpush1.bf16.msra.mxu0 %v541
    %577 = vmatprep.subr.bf16.mxu0 0
    %578 = vmatpush1.bf16.msra.mxu0 %v542
    %579 = vmatprep.subr.bf16.mxu0 0
    %580 = vmatpush1.bf16.msra.mxu0 %v543
    %581 = vmatprep.subr.bf16.mxu0 0
    %582 = vmatpush1.bf16.msra.mxu0 %v544
    %583 = vmatprep.subr.bf16.mxu0 0
    %584 = vmatpush1.bf16.msra.mxu0 %v545
    %585 = vmatprep.subr.bf16.mxu0 0
    %586 = vmatpush1.bf16.msra.mxu0 %v546
    %587 = vmatprep.subr.bf16.mxu0 0
    %588 = vmatpush1.bf16.msra.mxu0 %v547
    %589 = vmatprep.subr.bf16.mxu0 0
    %590 = vmatpush1.bf16.msra.mxu0 %v548
    %591 = vmatprep.subr.bf16.mxu0 0
    %592 = vmatpush1.bf16.msra.mxu0 %v549
    %593 = vmatprep.subr.bf16.mxu0 0
    %594 = vmatpush1.bf16.msra.mxu0 %v550
    %595 = vmatprep.subr.bf16.mxu0 0
    %596 = vmatpush1.bf16.msra.mxu0 %v551
    %597 = vmatprep.subr.bf16.mxu0 0
    %598 = vmatpush1.bf16.msra.mxu0 %v552
    %599 = vmatprep.subr.bf16.mxu0 0
    %600 = vmatpush1.bf16.msra.mxu0 %v553
    %601 = vmatprep.subr.bf16.mxu0 0
    %602 = vmatpush1.bf16.msra.mxu0 %v554
    %603 = vmatprep.mubr.bf16.mxu0 %v468
    %604 = vmatmul.mubr.bf16.gmra.mrb[0].mxu0 %v467
    %v605 = vpop.f32.mrb[0].mxu0
    %v606 = vadd.f32 %v473, %v605
    %v607 = vpop.f32.mrb[0].mxu0
    %v608 = vpop.f32.mrb[0].mxu0
    %v609 = vpop.f32.mrb[0].mxu0
    %610 = vdwg.mxu0
    %v611 = vmax.f32 %v606, 0.0
    %v612 = vld [vmem:[#allocation10] sm:$0xf]
    %v613 = vld [vmem:[#allocation10 + $0x4] sm:$0xf]
    %v614 = vld [vmem:[#allocation10 + $0x8] sm:$0xf]
    %v615 = vld [vmem:[#allocation10 + $0xc] sm:$0xf]
    %v616 = vld [vmem:[#allocation10 + $0x10] sm:$0xf]
    %v617 = vld [vmem:[#allocation10 + $0x14] sm:$0xf]
    %v618 = vld [vmem:[#allocation10 + $0x18] sm:$0xf]
    %v619 = vld [vmem:[#allocation10 + $0x1c] sm:$0xf]
    %v620 = vld [vmem:[#allocation10 + $0x20] sm:$0xf]
    %v621 = vld [vmem:[#allocation10 + $0x24] sm:$0xf]
    %v622 = vld [vmem:[#allocation10 + $0x28] sm:$0xf]
    %v623 = vld [vmem:[#allocation10 + $0x2c] sm:$0xf]
    %v624 = vld [vmem:[#allocation10 + $0x30] sm:$0xf]
    %v625 = vld [vmem:[#allocation10 + $0x34] sm:$0xf]
    %v626 = vld [vmem:[#allocation10 + $0x38] sm:$0xf]
    %v627 = vld [vmem:[#allocation10 + $0x3c] sm:$0xf]
    %v628 = vld [vmem:[%s8] sm:$0x1]
    %v629 = vpack.c.bf16 %v611, %v611
    %v631 = vlaneseq
    %v632 = vshrl.u32 %v631, 7
    %v633 = vsub.s32 0, %v632
    %v634 = vrot.slane %v628, %v633
    %v652 = vunpack.c.l.b16 %v612
    %v653 = vunpack.c.l.b16 %v613
    %v654 = vunpack.c.l.b16 %v614
    %v655 = vunpack.c.l.b16 %v615
    %v656 = vunpack.c.l.b16 %v616
    %v657 = vunpack.c.l.b16 %v617
    %v658 = vunpack.c.l.b16 %v618
    %v659 = vunpack.c.l.b16 %v619
    %v660 = vunpack.c.l.b16 %v620
    %v661 = vunpack.c.l.b16 %v621
    %v662 = vunpack.c.l.b16 %v622
    %v663 = vunpack.c.l.b16 %v623
    %v664 = vunpack.c.l.b16 %v624
    %v665 = vunpack.c.l.b16 %v625
    %v666 = vunpack.c.l.b16 %v626
    %v667 = vunpack.c.l.b16 %v627
    %v668 = vpack.c.b16 %v653, %v652
    %v669 = vpack.c.b16 %v655, %v654
    %v670 = vpack.c.b16 %v657, %v656
    %v671 = vpack.c.b16 %v659, %v658
    %v672 = vpack.c.b16 %v661, %v660
    %v673 = vpack.c.b16 %v663, %v662
    %v674 = vpack.c.b16 %v665, %v664
    %v675 = vpack.c.b16 %v667, %v666
    %684 = vmatprep.subr.bf16.mxu0 0
    %685 = vmatpush1.bf16.msra.mxu0 %v668
    %686 = vmatprep.subr.bf16.mxu0 0
    %687 = vmatpush1.bf16.msra.mxu0 %v669
    %688 = vmatprep.subr.bf16.mxu0 0
    %689 = vmatpush1.bf16.msra.mxu0 %v670
    %690 = vmatprep.subr.bf16.mxu0 0
    %691 = vmatpush1.bf16.msra.mxu0 %v671
    %692 = vmatprep.subr.bf16.mxu0 0
    %693 = vmatpush1.bf16.msra.mxu0 %v672
    %694 = vmatprep.subr.bf16.mxu0 0
    %695 = vmatpush1.bf16.msra.mxu0 %v673
    %696 = vmatprep.subr.bf16.mxu0 0
    %697 = vmatpush1.bf16.msra.mxu0 %v674
    %698 = vmatprep.subr.bf16.mxu0 0
    %699 = vmatpush1.bf16.msra.mxu0 %v675
    %700 = vmatprep.subr.bf16.mxu0 0
    %701 = vmatpush1.bf16.msra.mxu0 0
    %702 = vmatprep.subr.bf16.mxu0 0
    %703 = vmatpush1.bf16.msra.mxu0 0
    %704 = vmatprep.subr.bf16.mxu0 0
    %705 = vmatpush1.bf16.msra.mxu0 0
    %706 = vmatprep.subr.bf16.mxu0 0
    %707 = vmatpush1.bf16.msra.mxu0 0
    %708 = vmatprep.subr.bf16.mxu0 0
    %709 = vmatpush1.bf16.msra.mxu0 0
    %710 = vmatprep.subr.bf16.mxu0 0
    %711 = vmatpush1.bf16.msra.mxu0 0
    %712 = vmatprep.subr.bf16.mxu0 0
    %713 = vmatpush1.bf16.msra.mxu0 0
    %714 = vmatprep.subr.bf16.mxu0 0
    %715 = vmatpush1.bf16.msra.mxu0 0
    %716 = vmatprep.mubr.bf16.mxu0 0
    %717 = vmatmul.mubr.bf16.gmra.mrb[0].mxu0 %v629
    %v718 = vpop.f32.mrb[0].mxu0
    %v719 = vadd.f32 %v634, %v718
    %v720 = vpop.f32.mrb[0].mxu0
    %v721 = vpop.f32.mrb[0].mxu0
    %v722 = vpop.f32.mrb[0].mxu0
    %723 = vdwg.mxu0
    %v724 = vmax.f32 %v719, 0.0
    %725 = vst [vmem:[#allocation11] sm:$0xff] %v724
    // Predicated region
    $region58: #{tpu_custom_call.1} parent=1 // pred_check
      _
    $region59: #{tpu_custom_call.1} parent=1 // pred_check_branch
      %727 = sbr.rel (0) target = $region61
    $region60: #{tpu_custom_call.1} parent=1 // pred_region
      %s729 = ssub.s32 128, 128
      %730 = vsyncadd [#allocation4], %s729
      %s732 = sshll.u32 [#allocation11], 4
      %s733 = int_to_ptr.vmem [resolvable:$true] %s732
      %735 = dma.vmem_to_hbm [thread:$0]  %s733, 128, %s9, [#allocation4]
    $region61: #{tpu_custom_call.1} parent=1 // pred_fallthru
      _
    // Predicated region
    $region62: #{tpu_custom_call.1} parent=1 // pred_check
      _
    $region63: #{tpu_custom_call.1} parent=1 // pred_check_branch
      %737 = sbr.rel (0) target = $region65
    $region64: #{tpu_custom_call.1} parent=1 // pred_region
      %738 = dma.done [#allocation4], 128
    $region65: #{tpu_custom_call.1} parent=1 // pred_fallthru
      _
    %739 = vsyncpa [#allocation3], 1
    %740 = vsyncpa [#allocation6], 1
    %741 = vsyncpa [#allocation9], 1
    %742 = vsyncpa [#allocation4], 1

</llo_original>
